<compile_context>
chip_gen: v7x
topology: tpu7x:2x2x1
jax: 0.10.0
libtpu: 0.0.40
codegen_flags: <defaults>
</compile_context>

<pallas_src>
import functools

import jax
import jax.numpy as jnp
import numpy as np
from jax.experimental import pallas as pl
from jax.experimental.pallas import tpu as pltpu


def _round_up(n: int, m: int) -> int:
    return ((n + m - 1) // m) * m


def _attention_kernel(x_ref, w_ref, v_ref, o_ref, *, t_real: int,
                      tanh_in_bf16: bool):
    # x_ref: (BB, Tp, Dp) bf16   w_ref: (Dp, Dp) bf16
    # v_ref: (1, Dp) f32         o_ref: (BB, Dp) f32
    bb, tp, dp = x_ref.shape

    # Load the x tile ONCE; reused for projection and weighted sum.
    x = x_ref[...]                                             # (BB, Tp, Dp) bf16

    # ---- projection on the MXU: bf16 inputs, f32 accumulation ----
    # Flattening (BB, Tp) -> BB*Tp rows is layout-preserving (Tp % 8 == 0).
    y = jnp.dot(x.reshape(bb * tp, dp), w_ref[...],
                preferred_element_type=jnp.float32)            # (BB*Tp, Dp) f32
    y = y.reshape(bb, tp, dp)

    # ---- scores: tanh (EUP) * att_v (VPU), lane reduce (XLU) ----
    if tanh_in_bf16:
        th = jnp.tanh(y.astype(jnp.bfloat16)).astype(jnp.float32)
    else:
        th = jnp.tanh(y)
    v = v_ref[...].reshape(1, 1, dp)                           # (1, 1, Dp) f32
    s = jnp.sum(th * v, axis=-1, keepdims=True)                # (BB, Tp, 1) f32

    # Mask padded timesteps out of the softmax (static branch; f32 constant).
    if tp != t_real:
        valid = jax.lax.broadcasted_iota(jnp.int32, (1, tp, 1), 1) < t_real
        s = jnp.where(valid, s, jnp.float32(-1e30))

    # ---- batched softmax over T (no per-example unroll) ----
    m = jnp.max(s, axis=1, keepdims=True)                      # (BB, 1, 1)
    e = jnp.exp(s - m)                                         # (BB, Tp, 1)
    denom = jnp.sum(e, axis=1, keepdims=True)                  # (BB, 1, 1)
    w = e * pl.reciprocal(denom, approx=True)                  # (BB, Tp, 1)

    # ---- weighted sum over T: one dense (BB, Dp) store ----
    o_ref[...] = jnp.sum(x.astype(jnp.float32) * w,
                         axis=1).astype(o_ref.dtype)           # (BB, Dp)


def _choose_block_b(batch: int, t_pad: int, d_pad: int,
                    vmem_budget_bytes: int) -> int:
    # Honest per-example footprint: bf16 x double-buffer (2*2 B/elem) plus the
    # in-kernel f32 temporaries (y, tanh(y), weighted product) ~12 B/elem,
    # plus a little slack for softmax temps / output buffers.
    per_ex = t_pad * d_pad * 18 + d_pad * 16
    cap = max(8, (vmem_budget_bytes // max(per_ex, 1)) // 8 * 8)
    # Target ~512 rows of BB*Tp per step: fills the MXU M dim (4x128 on v5e)
    # and amortizes per-grid-step overhead.
    bb = max(8, _round_up(-(-512 // t_pad), 8))
    bb = min(bb, cap)
    b_ceil = _round_up(batch, 8)
    bb = min(bb, b_ceil)
    # Prefer an even number of (>=2) grid steps when the batch allows it
    # (v7x has 2 TensorCores); best-effort downward scan.
    if b_ceil > bb:
        for cand in range(bb, 7, -8):
            if (-(-b_ceil // cand)) % 2 == 0:
                bb = cand
                break
    return bb


def attention_forward(x, att_W, att_v, op="attsum", mask=None):
    """x: (B, T, D); att_W: (D, D); att_v: (D,). Returns (B, D) float32."""
    assert op in ("attsum", "attmean")
    B, T, D = x.shape
    d_pad = _round_up(D, 128)
    t_pad = _round_up(T, 8)

    # Generation-aware knobs.
    try:
        kind = jax.devices()[0].device_kind.lower()
    except Exception:  # pragma: no cover
        kind = ""
    is_v5 = "v5" in kind
    is_v7 = "v7" in kind
    # v7x has 64 MiB physical VMEM; v5e/v6e have 128 MiB.
    vmem_cap = (40 << 20) if is_v7 else (64 << 20)
    tanh_in_bf16 = not is_v5   # v5e EUP has no bf16 path

    bb = _choose_block_b(B, t_pad, d_pad, vmem_cap - (4 << 20))
    b_pad = _round_up(B, bb)
    grid = (b_pad // bb,)

    # Cast x to bf16 ONCE here (halves HBM traffic) and zero-pad to
    # TPU-friendly shapes.  Padded D columns are inert (W/v zero-padded),
    # padded T rows are masked in-kernel, padded B rows are sliced off.
    xp = x.astype(jnp.bfloat16)
    if (b_pad, t_pad, d_pad) != (B, T, D):
        xp = jnp.pad(xp, ((0, b_pad - B), (0, t_pad - T), (0, d_pad - D)))
    wp = jnp.pad(att_W.astype(jnp.bfloat16), ((0, d_pad - D), (0, d_pad - D)))
    vp = jnp.pad(att_v.astype(jnp.float32), (0, d_pad - D)).reshape(1, d_pad)

    # Honest VMEM estimate: pipeline buffers + in-kernel f32 temporaries.
    vmem_bytes = int(
        2 * bb * t_pad * d_pad * 2        # x pipeline double-buffer (bf16)
        + 2 * d_pad * d_pad * 2           # W pipeline buffers (bf16)
        + 2 * d_pad * 4                   # att_v pipeline buffers
        + 2 * bb * d_pad * 4              # output pipeline buffers
        + 3 * bb * t_pad * d_pad * 4      # y / tanh(y) / weighted-product f32
        + 6 * bb * t_pad * 4              # scores / softmax temporaries
        + (2 << 20))                      # slack
    vmem_bytes = max(8 << 20, min(vmem_bytes, vmem_cap))

    kernel = functools.partial(_attention_kernel, t_real=T,
                               tanh_in_bf16=tanh_in_bf16)

    out = pl.pallas_call(
        kernel,
        out_shape=jax.ShapeDtypeStruct((b_pad, d_pad), jnp.float32),
        grid_spec=pltpu.PrefetchScalarGridSpec(
            num_scalar_prefetch=0,
            grid=grid,
            in_specs=[
                pl.BlockSpec((bb, t_pad, d_pad), lambda i: (i, 0, 0)),
                # TODO(synk): W / att_v are grid-invariant; pipeline_mode=
                # pl.Buffered(1) would halve their pipeline VMEM footprint.
                pl.BlockSpec((d_pad, d_pad), lambda i: (0, 0)),
                pl.BlockSpec((1, d_pad), lambda i: (0, 0)),
            ],
            out_specs=pl.BlockSpec((bb, d_pad), lambda i: (i, 0)),
        ),
        compiler_params=pltpu.CompilerParams(
            dimension_semantics=("parallel",),
            vmem_limit_bytes=vmem_bytes,
        ),
    )(xp, wp, vp)

    out = out[:B, :D]
    if op == "attmean":
        # mask holds the number of non-padding tokens per instance (B,).
        out = out / mask.reshape(B, 1).astype(jnp.float32)
    return out.astype(jnp.float32)


def _reference(x, att_W, att_v):
    y = jnp.einsum("btd,de->bte", x, att_W)
    scores = jnp.einsum("d,btd->bt", att_v, jnp.tanh(y))
    w = jax.nn.softmax(scores, axis=1)
    return jnp.sum(x * w[:, :, None], axis=1)


if __name__ == "__main__":
    # Small, deliberately unaligned shapes (exercise D/T/B padding + masking).
    B, T, D = 4, 12, 48
    key = jax.random.PRNGKey(0)
    kx, kv, kw = jax.random.split(key, 3)

    x = jax.random.normal(kx, (B, T, D), dtype=jnp.float32)
    # Deterministic synthetic parameters (mirrors torch.rand(...) * init_stdev).
    init_stdev = 0.01
    att_v = jax.random.uniform(kv, (D,), dtype=jnp.float32) * init_stdev
    att_W = jax.random.uniform(kw, (D, D), dtype=jnp.float32) * init_stdev

    out = attention_forward(x, att_W, att_v, op="attsum")
    out = jax.block_until_ready(out)

    ref = _reference(x, att_W, att_v)
    # bf16 x / W / tanh + approximate reciprocal => looser tolerance than f32.
    np.testing.assert_allclose(np.asarray(out), np.asarray(ref),
                               rtol=2e-2, atol=5e-3)

    print("KERNEL_OK")
</pallas_src>

<mosaic_0001>
module attributes {stable_mosaic.version = 11 : i64} {
  func.func @_attention_kernel(%arg0: i32, %arg1: memref<8x16x128xbf16, #tpu.memory_space<vmem>>, %arg2: memref<128x128xbf16, #tpu.memory_space<vmem>>, %arg3: memref<1x128xf32, #tpu.memory_space<vmem>>, %arg4: memref<8x128xf32, #tpu.memory_space<vmem>>) attributes {dimension_semantics = [#tpu.dimension_semantics<parallel>], iteration_bounds = array<i64: 1>, scalar_prefetch = 0 : i64, scratch_operands = 0 : i64, tpu.core_type = #tpu.core_type<tc>, window_params = [{transform_indices = @transform_0, window_bounds = array<i64: 8, 16, 128>}, {pipeline_mode = #tpu.pipeline_mode<synchronous>, transform_indices = @transform_1, window_bounds = array<i64: 128, 128>}, {pipeline_mode = #tpu.pipeline_mode<synchronous>, transform_indices = @transform_2, window_bounds = array<i64: 1, 128>}, {transform_indices = @transform_3, window_bounds = array<i64: 8, 128>}]} {
    %c0 = arith.constant 0 : index
    %c0_0 = arith.constant 0 : index
    %c0_1 = arith.constant 0 : index
    %0 = vector.load %arg1[%c0, %c0_0, %c0_1] : memref<8x16x128xbf16, #tpu.memory_space<vmem>>, vector<8x16x128xbf16>
    %1 = vector.shape_cast %0 : vector<8x16x128xbf16> to vector<128x128xbf16>
    %c0_2 = arith.constant 0 : index
    %c0_3 = arith.constant 0 : index
    %2 = vector.load %arg2[%c0_2, %c0_3] : memref<128x128xbf16, #tpu.memory_space<vmem>>, vector<128x128xbf16>
    %cst = arith.constant dense<0.000000e+00> : vector<128x128xf32>
    %3 = tpu.matmul %1, %2, %cst {dimension_numbers = #tpu.dot_dimension_numbers<[1], [0], [0], [1], [0, 0, 1, 1], [], []>} : vector<128x128xbf16>, vector<128x128xbf16>, vector<128x128xf32> -> vector<128x128xf32>
    %4 = vector.shape_cast %3 : vector<128x128xf32> to vector<8x16x128xf32>
    %5 = arith.truncf %4 : vector<8x16x128xf32> to vector<8x16x128xbf16>
    %6 = math.tanh %5 : vector<8x16x128xbf16>
    %7 = arith.extf %6 : vector<8x16x128xbf16> to vector<8x16x128xf32>
    %c0_4 = arith.constant 0 : index
    %c0_5 = arith.constant 0 : index
    %8 = vector.load %arg3[%c0_4, %c0_5] : memref<1x128xf32, #tpu.memory_space<vmem>>, vector<1x128xf32>
    %9 = vector.shape_cast %8 : vector<1x128xf32> to vector<1x1x128xf32>
    %10 = vector.broadcast %9 : vector<1x1x128xf32> to vector<8x16x128xf32>
    %11 = arith.mulf %7, %10 : vector<8x16x128xf32>
    %cst_6 = arith.constant dense<0.000000e+00> : vector<8x16xf32>
    %12 = vector.multi_reduction <add>, %11, %cst_6 [2] : vector<8x16x128xf32> to vector<8x16xf32>
    %13 = vector.shape_cast %12 : vector<8x16xf32> to vector<8x16x1xf32>
    %14 = tpu.iota {dimensions = array<i32: 1>} : vector<1x16x1xi32>
    %c12_i32 = arith.constant 12 : i32
    %15 = vector.broadcast %c12_i32 : i32 to vector<1x16x1xi32>
    %16 = arith.cmpi slt, %14, %15 : vector<1x16x1xi32>
    %cst_7 = arith.constant -1.000000e+30 : f32
    %17 = vector.shape_cast %16 : vector<1x16x1xi1> to vector<1x16x1xi1>
    %18 = vector.broadcast %17 : vector<1x16x1xi1> to vector<8x16x1xi1>
    %19 = vector.broadcast %cst_7 : f32 to vector<8x16x1xf32>
    %20 = arith.select %18, %13, %19 : vector<8x16x1xi1>, vector<8x16x1xf32>
    %cst_8 = arith.constant dense<0xFF800000> : vector<8x1xf32>
    %21 = vector.multi_reduction <maximumf>, %20, %cst_8 [1] : vector<8x16x1xf32> to vector<8x1xf32>
    %22 = vector.shape_cast %21 : vector<8x1xf32> to vector<8x1x1xf32>
    %23 = vector.broadcast %22 : vector<8x1x1xf32> to vector<8x16x1xf32>
    %24 = arith.subf %20, %23 : vector<8x16x1xf32>
    %25 = math.exp %24 : vector<8x16x1xf32>
    %cst_9 = arith.constant dense<0.000000e+00> : vector<8x1xf32>
    %26 = vector.multi_reduction <add>, %25, %cst_9 [1] : vector<8x16x1xf32> to vector<8x1xf32>
    %27 = vector.shape_cast %26 : vector<8x1xf32> to vector<8x1x1xf32>
    %28 = tpu.reciprocal %27 {approx = true} : vector<8x1x1xf32> -> vector<8x1x1xf32>
    %29 = vector.broadcast %28 : vector<8x1x1xf32> to vector<8x16x1xf32>
    %30 = arith.mulf %25, %29 : vector<8x16x1xf32>
    %31 = arith.extf %0 : vector<8x16x128xbf16> to vector<8x16x128xf32>
    %32 = vector.broadcast %30 : vector<8x16x1xf32> to vector<8x16x128xf32>
    %33 = arith.mulf %31, %32 : vector<8x16x128xf32>
    %cst_10 = arith.constant dense<0.000000e+00> : vector<8x128xf32>
    %34 = vector.multi_reduction <add>, %33, %cst_10 [1] : vector<8x16x128xf32> to vector<8x128xf32>
    %c0_11 = arith.constant 0 : index
    %c0_12 = arith.constant 0 : index
    %35 = vector.load %arg4[%c0_11, %c0_12] : memref<8x128xf32, #tpu.memory_space<vmem>>, vector<8x128xf32>
    tpu.vector_store %arg4[%c0_11, %c0_12], %34 {strides = array<i32>} : memref<8x128xf32, #tpu.memory_space<vmem>>, vector<8x128xf32>,
    return
  }
  func.func @transform_0(%arg0: i32) -> (i32, i32, i32) {
    %c0_i32 = arith.constant 0 : i32
    %c0_i32_0 = arith.constant 0 : i32
    %c0_i32_1 = arith.constant 0 : i32
    return %arg0, %c0_i32, %c0_i32_0 : i32, i32, i32
  }
  func.func @transform_1(%arg0: i32) -> (i32, i32) {
    %c0_i32 = arith.constant 0 : i32
    %c0_i32_0 = arith.constant 0 : i32
    %c0_i32_1 = arith.constant 0 : i32
    return %c0_i32, %c0_i32_0 : i32, i32
  }
  func.func @transform_2(%arg0: i32) -> (i32, i32) {
    %c0_i32 = arith.constant 0 : i32
    %c0_i32_0 = arith.constant 0 : i32
    %c0_i32_1 = arith.constant 0 : i32
    return %c0_i32, %c0_i32_0 : i32, i32
  }
  func.func @transform_3(%arg0: i32) -> (i32, i32) {
    %c0_i32 = arith.constant 0 : i32
    %c0_i32_0 = arith.constant 0 : i32
    return %arg0, %c0_i32 : i32, i32
  }
}

</mosaic_0001>

<llo_original>
// kernel: tpu_custom_call.1
$region0: #{tpu_custom_call.1}
  #allocation0 [shape = 'u32[]', space=smem, size = 0x4, offset = 0x4, fixed_abs, tag = 'smem constant byte address 0x4 - core index']
  #allocation1 [shape = 'u32[144,128]{1,0:T(1,128)}', space=vmem, size = 0x12000, scoped, tag = 'internal scratch']
  %s0 = inlined_call_operand.hbm [shape: bf16[8,16,128], index: 0, kind: input, shape index: {}]
  %s1 = inlined_call_operand.hbm [shape: bf16[128,128], index: 1, kind: input, shape index: {}]
  %s2 = inlined_call_operand.vmem [shape: f32[1,128], index: 2, kind: input, shape index: {}]
  %s3 = inlined_call_operand.hbm [shape: f32[8,128], index: 3, kind: output, shape index: {}]
  %s4 = sld [smem:[#allocation0]]
  $region30: #{tpu_custom_call.1} parent=0
    _
  %s6 = ssub.s32 1, %s4
  %s7 = scalar_select 0, %s6, %s4
  $region1: #{tpu_custom_call.1} parent=0
    #allocation2 [shape = 'u8[32768]{0}', space=vmem, size = 0x8000, scoped, tag = 'input window, operand 0, single buffered']
    #allocation3 [shape = 's32[1]{0}', space=sflag, size = 0x4, scoped, tag = 'scoped memory for tpu_custom_call.1']
    #allocation4 [shape = 's32[1]{0}', space=sflag, size = 0x4, scoped, tag = 'scoped memory for tpu_custom_call.1']
    #allocation5 [shape = 'u8[32768]{0}', space=vmem, size = 0x8000, scoped, tag = 'input window, operand 1, single buffered']
    #allocation6 [shape = 's32[1]{0}', space=sflag, size = 0x4, scoped, tag = 'scoped memory for tpu_custom_call.1']
    #allocation7 [shape = 'u8[4096]{0}', space=vmem, size = 0x1000, scoped, tag = 'output window, operand 0, single buffered']
    %8 = vsyncpa [#allocation3], 0
    %9 = vsyncpa [#allocation6], 0
    %10 = vsyncpa [#allocation4], 0
    // Predicated region
    $region2: #{tpu_custom_call.1} parent=1 // pred_check
      _
    $region3: #{tpu_custom_call.1} parent=1 // pred_check_branch
      %12 = sbr.rel (0) target = $region5
    $region4: #{tpu_custom_call.1} parent=1 // pred_region
      %s14 = ssub.s32 1024, 1024
      %15 = vsyncadd [#allocation3], %s14
      %s16 = sshll.u32 [#allocation2], 4
      %s17 = int_to_ptr.vmem [resolvable:$true] %s16
      %22 = dma.hbm_to_vmem [thread:$0]  %s0, 1024, %s17, [#allocation3], 64, 64, 4
    $region5: #{tpu_custom_call.1} parent=1 // pred_fallthru
      _
    // Predicated region
    $region6: #{tpu_custom_call.1} parent=1 // pred_check
      _
    $region7: #{tpu_custom_call.1} parent=1 // pred_check_branch
      %24 = sbr.rel (0) target = $region9
    $region8: #{tpu_custom_call.1} parent=1 // pred_region
      %s26 = ssub.s32 1024, 1024
      %27 = vsyncadd [#allocation6], %s26
      %s28 = sshll.u32 [#allocation5], 4
      %s29 = int_to_ptr.vmem [resolvable:$true] %s28
      %34 = dma.hbm_to_vmem [thread:$0]  %s1, 1024, %s29, [#allocation6], 64, 64, 4
    $region9: #{tpu_custom_call.1} parent=1 // pred_fallthru
      _
    // Predicated region
    $region10: #{tpu_custom_call.1} parent=1 // pred_check
      _
    $region11: #{tpu_custom_call.1} parent=1 // pred_check_branch
      %36 = sbr.rel (0) target = $region13
    $region12: #{tpu_custom_call.1} parent=1 // pred_region
      _
    $region13: #{tpu_custom_call.1} parent=1 // pred_fallthru
      _
    // Predicated region
    $region14: #{tpu_custom_call.1} parent=1 // pred_check
      _
    $region15: #{tpu_custom_call.1} parent=1 // pred_check_branch
      %38 = sbr.rel (0) target = $region17
    $region16: #{tpu_custom_call.1} parent=1 // pred_region
      %39 = dma.done [#allocation3], 1024
    $region17: #{tpu_custom_call.1} parent=1 // pred_fallthru
      _
    // Predicated region
    $region18: #{tpu_custom_call.1} parent=1 // pred_check
      _
    $region19: #{tpu_custom_call.1} parent=1 // pred_check_branch
      %41 = sbr.rel (0) target = $region21
    $region20: #{tpu_custom_call.1} parent=1 // pred_region
      %42 = dma.done [#allocation6], 1024
    $region21: #{tpu_custom_call.1} parent=1 // pred_fallthru
      _
    %v44 = vld [vmem:[#allocation2] sm:$0xf]
    %v45 = vld [vmem:[#allocation2 + $0x4] sm:$0xf]
    %v46 = vld [vmem:[#allocation2 + $0x8] sm:$0xf]
    %v47 = vld [vmem:[#allocation2 + $0xc] sm:$0xf]
    %v48 = vld [vmem:[#allocation2 + $0x10] sm:$0xf]
    %v49 = vld [vmem:[#allocation2 + $0x14] sm:$0xf]
    %v50 = vld [vmem:[#allocation2 + $0x18] sm:$0xf]
    %v51 = vld [vmem:[#allocation2 + $0x1c] sm:$0xf]
    %v52 = vld [vmem:[#allocation2 + $0x20] sm:$0xf]
    %v53 = vld [vmem:[#allocation2 + $0x24] sm:$0xf]
    %v54 = vld [vmem:[#allocation2 + $0x28] sm:$0xf]
    %v55 = vld [vmem:[#allocation2 + $0x2c] sm:$0xf]
    %v56 = vld [vmem:[#allocation2 + $0x30] sm:$0xf]
    %v57 = vld [vmem:[#allocation2 + $0x34] sm:$0xf]
    %v58 = vld [vmem:[#allocation2 + $0x38] sm:$0xf]
    %v59 = vld [vmem:[#allocation2 + $0x3c] sm:$0xf]
    %v60 = vld [vmem:[#allocation5] sm:$0xf]
    %v61 = vld [vmem:[#allocation5 + $0x4] sm:$0xf]
    %v62 = vld [vmem:[#allocation5 + $0x8] sm:$0xf]
    %v63 = vld [vmem:[#allocation5 + $0xc] sm:$0xf]
    %v64 = vld [vmem:[#allocation5 + $0x10] sm:$0xf]
    %v65 = vld [vmem:[#allocation5 + $0x14] sm:$0xf]
    %v66 = vld [vmem:[#allocation5 + $0x18] sm:$0xf]
    %v67 = vld [vmem:[#allocation5 + $0x1c] sm:$0xf]
    %v68 = vld [vmem:[#allocation5 + $0x20] sm:$0xf]
    %v69 = vld [vmem:[#allocation5 + $0x24] sm:$0xf]
    %v70 = vld [vmem:[#allocation5 + $0x28] sm:$0xf]
    %v71 = vld [vmem:[#allocation5 + $0x2c] sm:$0xf]
    %v72 = vld [vmem:[#allocation5 + $0x30] sm:$0xf]
    %v73 = vld [vmem:[#allocation5 + $0x34] sm:$0xf]
    %v74 = vld [vmem:[#allocation5 + $0x38] sm:$0xf]
    %v75 = vld [vmem:[#allocation5 + $0x3c] sm:$0xf]
    %v92 = vunpack.c.l.b16 %v44
    %v93 = vunpack.c.l.b16 %v45
    %v94 = vunpack.c.l.b16 %v46
    %v95 = vunpack.c.l.b16 %v47
    %v96 = vunpack.c.l.b16 %v48
    %v97 = vunpack.c.l.b16 %v49
    %v98 = vunpack.c.l.b16 %v50
    %v99 = vunpack.c.l.b16 %v51
    %v100 = vunpack.c.l.b16 %v52
    %v101 = vunpack.c.l.b16 %v53
    %v102 = vunpack.c.l.b16 %v54
    %v103 = vunpack.c.l.b16 %v55
    %v104 = vunpack.c.l.b16 %v56
    %v105 = vunpack.c.l.b16 %v57
    %v106 = vunpack.c.l.b16 %v58
    %v107 = vunpack.c.l.b16 %v59
    %v108 = vpack.c.b16 %v93, %v92
    %v109 = vpack.c.b16 %v95, %v94
    %v110 = vpack.c.b16 %v97, %v96
    %v111 = vpack.c.b16 %v99, %v98
    %v112 = vpack.c.b16 %v101, %v100
    %v113 = vpack.c.b16 %v103, %v102
    %v114 = vpack.c.b16 %v105, %v104
    %v115 = vpack.c.b16 %v107, %v106
    %v140 = vunpack.c.l.b16 %v60
    %v141 = vunpack.c.l.b16 %v61
    %v142 = vunpack.c.l.b16 %v62
    %v143 = vunpack.c.l.b16 %v63
    %v144 = vunpack.c.l.b16 %v64
    %v145 = vunpack.c.l.b16 %v65
    %v146 = vunpack.c.l.b16 %v66
    %v147 = vunpack.c.l.b16 %v67
    %v148 = vunpack.c.l.b16 %v68
    %v149 = vunpack.c.l.b16 %v69
    %v150 = vunpack.c.l.b16 %v70
    %v151 = vunpack.c.l.b16 %v71
    %v152 = vunpack.c.l.b16 %v72
    %v153 = vunpack.c.l.b16 %v73
    %v154 = vunpack.c.l.b16 %v74
    %v155 = vunpack.c.l.b16 %v75
    %v156 = vpack.c.b16 %v141, %v140
    %v157 = vpack.c.b16 %v143, %v142
    %v158 = vpack.c.b16 %v145, %v144
    %v159 = vpack.c.b16 %v147, %v146
    %v160 = vpack.c.b16 %v149, %v148
    %v161 = vpack.c.b16 %v151, %v150
    %v162 = vpack.c.b16 %v153, %v152
    %v163 = vpack.c.b16 %v155, %v154
    %172 = vmatprep.subr.bf16.mxu0 0
    %173 = vmatpush1.bf16.msra.mxu0 %v156
    %174 = vmatprep.subr.bf16.mxu0 0
    %175 = vmatpush1.bf16.msra.mxu0 %v157
    %176 = vmatprep.subr.bf16.mxu0 0
    %177 = vmatpush1.bf16.msra.mxu0 %v158
    %178 = vmatprep.subr.bf16.mxu0 0
    %179 = vmatpush1.bf16.msra.mxu0 %v159
    %180 = vmatprep.subr.bf16.mxu0 0
    %181 = vmatpush1.bf16.msra.mxu0 %v160
    %182 = vmatprep.subr.bf16.mxu0 0
    %183 = vmatpush1.bf16.msra.mxu0 %v161
    %184 = vmatprep.subr.bf16.mxu0 0
    %185 = vmatpush1.bf16.msra.mxu0 %v162
    %186 = vmatprep.subr.bf16.mxu0 0
    %187 = vmatpush1.bf16.msra.mxu0 %v163
    %188 = vmatprep.subr.bf16.mxu0 0
    %189 = vmatpush1.bf16.msra.mxu0 0
    %190 = vmatprep.subr.bf16.mxu0 0
    %191 = vmatpush1.bf16.msra.mxu0 0
    %192 = vmatprep.subr.bf16.mxu0 0
    %193 = vmatpush1.bf16.msra.mxu0 0
    %194 = vmatprep.subr.bf16.mxu0 0
    %195 = vmatpush1.bf16.msra.mxu0 0
    %196 = vmatprep.subr.bf16.mxu0 0
    %197 = vmatpush1.bf16.msra.mxu0 0
    %198 = vmatprep.subr.bf16.mxu0 0
    %199 = vmatpush1.bf16.msra.mxu0 0
    %200 = vmatprep.subr.bf16.mxu0 0
    %201 = vmatpush1.bf16.msra.mxu0 0
    %202 = vmatprep.subr.bf16.mxu0 0
    %203 = vmatpush1.bf16.msra.mxu0 0
    %204 = vmatprep.mubr.bf16.mxu0 0
    %205 = vmatmul.mubr.bf16.gmra.mrb[0].mxu0 %v108
    %v206 = vpop.f32.mrb[0].mxu0
    %v207 = vadd.f32 0.0, %v206
    %v208 = vpop.f32.mrb[0].mxu0
    %v209 = vpop.f32.mrb[0].mxu0
    %v210 = vadd.f32 0.0, %v209
    %v211 = vpop.f32.mrb[0].mxu0
    %212 = vmatprep.mubr.bf16.mxu0 0
    %213 = vmatmul.mubr.bf16.gmra.mrb[0].mxu0 %v109
    %v214 = vpop.f32.mrb[0].mxu0
    %v215 = vadd.f32 0.0, %v214
    %v216 = vpop.f32.mrb[0].mxu0
    %v217 = vpop.f32.mrb[0].mxu0
    %v218 = vadd.f32 0.0, %v217
    %v219 = vpop.f32.mrb[0].mxu0
    %220 = vmatprep.mubr.bf16.mxu0 0
    %221 = vmatmul.mubr.bf16.gmra.mrb[0].mxu0 %v110
    %v222 = vpop.f32.mrb[0].mxu0
    %v223 = vadd.f32 0.0, %v222
    %v224 = vpop.f32.mrb[0].mxu0
    %v225 = vpop.f32.mrb[0].mxu0
    %v226 = vadd.f32 0.0, %v225
    %v227 = vpop.f32.mrb[0].mxu0
    %228 = vmatprep.mubr.bf16.mxu0 0
    %229 = vmatmul.mubr.bf16.gmra.mrb[0].mxu0 %v111
    %v230 = vpop.f32.mrb[0].mxu0
    %v231 = vadd.f32 0.0, %v230
    %v232 = vpop.f32.mrb[0].mxu0
    %v233 = vpop.f32.mrb[0].mxu0
    %v234 = vadd.f32 0.0, %v233
    %v235 = vpop.f32.mrb[0].mxu0
    %236 = vmatprep.mubr.bf16.mxu0 0
    %237 = vmatmul.mubr.bf16.gmra.mrb[0].mxu0 %v112
    %v238 = vpop.f32.mrb[0].mxu0
    %v239 = vadd.f32 0.0, %v238
    %v240 = vpop.f32.mrb[0].mxu0
    %v241 = vpop.f32.mrb[0].mxu0
    %v242 = vadd.f32 0.0, %v241
    %v243 = vpop.f32.mrb[0].mxu0
    %244 = vmatprep.mubr.bf16.mxu0 0
    %245 = vmatmul.mubr.bf16.gmra.mrb[0].mxu0 %v113
    %v246 = vpop.f32.mrb[0].mxu0
    %v247 = vadd.f32 0.0, %v246
    %v248 = vpop.f32.mrb[0].mxu0
    %v249 = vpop.f32.mrb[0].mxu0
    %v250 = vadd.f32 0.0, %v249
    %v251 = vpop.f32.mrb[0].mxu0
    %252 = vmatprep.mubr.bf16.mxu0 0
    %253 = vmatmul.mubr.bf16.gmra.mrb[0].mxu0 %v114
    %v254 = vpop.f32.mrb[0].mxu0
    %v255 = vadd.f32 0.0, %v254
    %v256 = vpop.f32.mrb[0].mxu0
    %v257 = vpop.f32.mrb[0].mxu0
    %v258 = vadd.f32 0.0, %v257
    %v259 = vpop.f32.mrb[0].mxu0
    %260 = vmatprep.mubr.bf16.mxu0 0
    %261 = vmatmul.mubr.bf16.gmra.mrb[0].mxu0 %v115
    %v262 = vpop.f32.mrb[0].mxu0
    %v263 = vadd.f32 0.0, %v262
    %v264 = vpop.f32.mrb[0].mxu0
    %v265 = vpop.f32.mrb[0].mxu0
    %v266 = vadd.f32 0.0, %v265
    %v267 = vpop.f32.mrb[0].mxu0
    %268 = vdwg.mxu0
    %v269 = vpack.c.bf16 %v210, %v207
    %v270 = vpack.c.bf16 %v218, %v215
    %v271 = vpack.c.bf16 %v226, %v223
    %v272 = vpack.c.bf16 %v234, %v231
    %v273 = vpack.c.bf16 %v242, %v239
    %v274 = vpack.c.bf16 %v250, %v247
    %v275 = vpack.c.bf16 %v258, %v255
    %v276 = vpack.c.bf16 %v266, %v263
    %v277 = vtanh.bf16.pop %v269
    %v278 = vtanh.bf16.pop %v270
    %v279 = vtanh.bf16.pop %v271
    %v280 = vtanh.bf16.pop %v272
    %v281 = vtanh.bf16.pop %v273
    %v282 = vtanh.bf16.pop %v274
    %v283 = vtanh.bf16.pop %v275
    %v284 = vtanh.bf16.pop %v276
    %v285 = vunpack.c.l.bf16 %v277
    %v286 = vunpack.c.h.bf16 %v277
    %v287 = vunpack.c.l.bf16 %v278
    %v288 = vunpack.c.h.bf16 %v278
    %v289 = vunpack.c.l.bf16 %v279
    %v290 = vunpack.c.h.bf16 %v279
    %v291 = vunpack.c.l.bf16 %v280
    %v292 = vunpack.c.h.bf16 %v280
    %v293 = vunpack.c.l.bf16 %v281
    %v294 = vunpack.c.h.bf16 %v281
    %v295 = vunpack.c.l.bf16 %v282
    %v296 = vunpack.c.h.bf16 %v282
    %v297 = vunpack.c.l.bf16 %v283
    %v298 = vunpack.c.h.bf16 %v283
    %v299 = vunpack.c.l.bf16 %v284
    %v300 = vunpack.c.h.bf16 %v284
    %v301 = vld [vmem:[%s2] sm:$0x1]
    %v303 = vlaneseq
    %v304 = vshrl.u32 %v303, 7
    %v305 = vsub.s32 0, %v304
    %v306 = vrot.slane %v301, %v305
    %v308 = vmul.f32 %v285, %v306
    %v309 = vmul.f32 %v286, %v306
    %v310 = vmul.f32 %v287, %v306
    %v311 = vmul.f32 %v288, %v306
    %v312 = vmul.f32 %v289, %v306
    %v313 = vmul.f32 %v290, %v306
    %v314 = vmul.f32 %v291, %v306
    %v315 = vmul.f32 %v292, %v306
    %v316 = vmul.f32 %v293, %v306
    %v317 = vmul.f32 %v294, %v306
    %v318 = vmul.f32 %v295, %v306
    %v319 = vmul.f32 %v296, %v306
    %v320 = vmul.f32 %v297, %v306
    %v321 = vmul.f32 %v298, %v306
    %v322 = vmul.f32 %v299, %v306
    %v323 = vmul.f32 %v300, %v306
    %324 = vadd.xlane.f32.xlu0 %v308
    %v325 = vpop.xlane.xlu0 %324
    %326 = vadd.xlane.f32.xlu0 %v309
    %v327 = vpop.xlane.xlu0 %326
    %328 = vadd.xlane.f32.xlu0 %v310
    %v329 = vpop.xlane.xlu0 %328
    %330 = vadd.xlane.f32.xlu0 %v311
    %v331 = vpop.xlane.xlu0 %330
    %332 = vadd.xlane.f32.xlu0 %v312
    %v333 = vpop.xlane.xlu0 %332
    %334 = vadd.xlane.f32.xlu0 %v313
    %v335 = vpop.xlane.xlu0 %334
    %336 = vadd.xlane.f32.xlu0 %v314
    %v337 = vpop.xlane.xlu0 %336
    %338 = vadd.xlane.f32.xlu0 %v315
    %v339 = vpop.xlane.xlu0 %338
    %340 = vadd.xlane.f32.xlu0 %v316
    %v341 = vpop.xlane.xlu0 %340
    %342 = vadd.xlane.f32.xlu0 %v317
    %v343 = vpop.xlane.xlu0 %342
    %344 = vadd.xlane.f32.xlu0 %v318
    %v345 = vpop.xlane.xlu0 %344
    %346 = vadd.xlane.f32.xlu0 %v319
    %v347 = vpop.xlane.xlu0 %346
    %348 = vadd.xlane.f32.xlu0 %v320
    %v349 = vpop.xlane.xlu0 %348
    %350 = vadd.xlane.f32.xlu0 %v321
    %v351 = vpop.xlane.xlu0 %350
    %352 = vadd.xlane.f32.xlu0 %v322
    %v353 = vpop.xlane.xlu0 %352
    %354 = vadd.xlane.f32.xlu0 %v323
    %v355 = vpop.xlane.xlu0 %354
    %v356 = vlaneseq
    %v357 = vshrl.u32 %v356, 7
    %v358 = vadd.s32 %v357, 8
    %vm359 = vcmp.lt.s32.totalorder %v357, 12
    %vm360 = vcmp.lt.s32.totalorder %v358, 12
    %v361 = vsel %vm359, 1, 0
    %v362 = vsel %vm360, 1, 0
    %vm363 = vcmp.eq.s32.totalorder %v361, 1
    %vm364 = vcmp.eq.s32.totalorder %v362, 1
    %v365 = vsel %vm363, %v325, -1e+30
    %v366 = vsel %vm364, %v327, -1e+30
    %v367 = vsel %vm363, %v329, -1e+30
    %v368 = vsel %vm364, %v331, -1e+30
    %v369 = vsel %vm363, %v333, -1e+30
    %v370 = vsel %vm364, %v335, -1e+30
    %v371 = vsel %vm363, %v337, -1e+30
    %v372 = vsel %vm364, %v339, -1e+30
    %v373 = vsel %vm363, %v341, -1e+30
    %v374 = vsel %vm364, %v343, -1e+30
    %v375 = vsel %vm363, %v345, -1e+30
    %v376 = vsel %vm364, %v347, -1e+30
    %v377 = vsel %vm363, %v349, -1e+30
    %v378 = vsel %vm364, %v351, -1e+30
    %v379 = vsel %vm363, %v353, -1e+30
    %v380 = vsel %vm364, %v355, -1e+30
    %v381 = vmax.f32 %v365, %v366
    %v382 = vrot.slane %v381, 4
    %v383 = vmax.f32 %v381, %v382
    %v384 = vrot.slane %v383, 2
    %v385 = vmax.f32 %v383, %v384
    %v386 = vrot.slane %v385, 1
    %v387 = vmax.f32 %v385, %v386
    %v388 = vmax.f32 %v367, %v368
    %v389 = vrot.slane %v388, 4
    %v390 = vmax.f32 %v388, %v389
    %v391 = vrot.slane %v390, 2
    %v392 = vmax.f32 %v390, %v391
    %v393 = vrot.slane %v392, 1
    %v394 = vmax.f32 %v392, %v393
    %v395 = vmax.f32 %v369, %v370
    %v396 = vrot.slane %v395, 4
    %v397 = vmax.f32 %v395, %v396
    %v398 = vrot.slane %v397, 2
    %v399 = vmax.f32 %v397, %v398
    %v400 = vrot.slane %v399, 1
    %v401 = vmax.f32 %v399, %v400
    %v402 = vmax.f32 %v371, %v372
    %v403 = vrot.slane %v402, 4
    %v404 = vmax.f32 %v402, %v403
    %v405 = vrot.slane %v404, 2
    %v406 = vmax.f32 %v404, %v405
    %v407 = vrot.slane %v406, 1
    %v408 = vmax.f32 %v406, %v407
    %v409 = vmax.f32 %v373, %v374
    %v410 = vrot.slane %v409, 4
    %v411 = vmax.f32 %v409, %v410
    %v412 = vrot.slane %v411, 2
    %v413 = vmax.f32 %v411, %v412
    %v414 = vrot.slane %v413, 1
    %v415 = vmax.f32 %v413, %v414
    %v416 = vmax.f32 %v375, %v376
    %v417 = vrot.slane %v416, 4
    %v418 = vmax.f32 %v416, %v417
    %v419 = vrot.slane %v418, 2
    %v420 = vmax.f32 %v418, %v419
    %v421 = vrot.slane %v420, 1
    %v422 = vmax.f32 %v420, %v421
    %v423 = vmax.f32 %v377, %v378
    %v424 = vrot.slane %v423, 4
    %v425 = vmax.f32 %v423, %v424
    %v426 = vrot.slane %v425, 2
    %v427 = vmax.f32 %v425, %v426
    %v428 = vrot.slane %v427, 1
    %v429 = vmax.f32 %v427, %v428
    %v430 = vmax.f32 %v379, %v380
    %v431 = vrot.slane %v430, 4
    %v432 = vmax.f32 %v430, %v431
    %v433 = vrot.slane %v432, 2
    %v434 = vmax.f32 %v432, %v433
    %v435 = vrot.slane %v434, 1
    %v436 = vmax.f32 %v434, %v435
    %v437 = vsub.f32 %v365, %v387
    %v438 = vsub.f32 %v366, %v387
    %v439 = vsub.f32 %v367, %v394
    %v440 = vsub.f32 %v368, %v394
    %v441 = vsub.f32 %v369, %v401
    %v442 = vsub.f32 %v370, %v401
    %v443 = vsub.f32 %v371, %v408
    %v444 = vsub.f32 %v372, %v408
    %v445 = vsub.f32 %v373, %v415
    %v446 = vsub.f32 %v374, %v415
    %v447 = vsub.f32 %v375, %v422
    %v448 = vsub.f32 %v376, %v422
    %v449 = vsub.f32 %v377, %v429
    %v450 = vsub.f32 %v378, %v429
    %v451 = vsub.f32 %v379, %v436
    %v452 = vsub.f32 %v380, %v436
    %v453 = vmul.f32 %v437, 1.442695
    %v454 = vpow.pop %v453
    %v455 = vmul.f32 %v438, 1.442695
    %v456 = vpow.pop %v455
    %v457 = vmul.f32 %v439, 1.442695
    %v458 = vpow.pop %v457
    %v459 = vmul.f32 %v440, 1.442695
    %v460 = vpow.pop %v459
    %v461 = vmul.f32 %v441, 1.442695
    %v462 = vpow.pop %v461
    %v463 = vmul.f32 %v442, 1.442695
    %v464 = vpow.pop %v463
    %v465 = vmul.f32 %v443, 1.442695
    %v466 = vpow.pop %v465
    %v467 = vmul.f32 %v444, 1.442695
    %v468 = vpow.pop %v467
    %v469 = vmul.f32 %v445, 1.442695
    %v470 = vpow.pop %v469
    %v471 = vmul.f32 %v446, 1.442695
    %v472 = vpow.pop %v471
    %v473 = vmul.f32 %v447, 1.442695
    %v474 = vpow.pop %v473
    %v475 = vmul.f32 %v448, 1.442695
    %v476 = vpow.pop %v475
    %v477 = vmul.f32 %v449, 1.442695
    %v478 = vpow.pop %v477
    %v479 = vmul.f32 %v450, 1.442695
    %v480 = vpow.pop %v479
    %v481 = vmul.f32 %v451, 1.442695
    %v482 = vpow.pop %v481
    %v483 = vmul.f32 %v452, 1.442695
    %v484 = vpow.pop %v483
    %v485 = vadd.f32 %v454, %v456
    %v486 = vrot.slane %v485, 4
    %v487 = vadd.f32 %v485, %v486
    %v488 = vrot.slane %v487, 2
    %v489 = vadd.f32 %v487, %v488
    %v490 = vrot.slane %v489, 1
    %v491 = vadd.f32 %v489, %v490
    %v492 = vadd.f32 %v458, %v460
    %v493 = vrot.slane %v492, 4
    %v494 = vadd.f32 %v492, %v493
    %v495 = vrot.slane %v494, 2
    %v496 = vadd.f32 %v494, %v495
    %v497 = vrot.slane %v496, 1
    %v498 = vadd.f32 %v496, %v497
    %v499 = vadd.f32 %v462, %v464
    %v500 = vrot.slane %v499, 4
    %v501 = vadd.f32 %v499, %v500
    %v502 = vrot.slane %v501, 2
    %v503 = vadd.f32 %v501, %v502
    %v504 = vrot.slane %v503, 1
    %v505 = vadd.f32 %v503, %v504
    %v506 = vadd.f32 %v466, %v468
    %v507 = vrot.slane %v506, 4
    %v508 = vadd.f32 %v506, %v507
    %v509 = vrot.slane %v508, 2
    %v510 = vadd.f32 %v508, %v509
    %v511 = vrot.slane %v510, 1
    %v512 = vadd.f32 %v510, %v511
    %v513 = vadd.f32 %v470, %v472
    %v514 = vrot.slane %v513, 4
    %v515 = vadd.f32 %v513, %v514
    %v516 = vrot.slane %v515, 2
    %v517 = vadd.f32 %v515, %v516
    %v518 = vrot.slane %v517, 1
    %v519 = vadd.f32 %v517, %v518
    %v520 = vadd.f32 %v474, %v476
    %v521 = vrot.slane %v520, 4
    %v522 = vadd.f32 %v520, %v521
    %v523 = vrot.slane %v522, 2
    %v524 = vadd.f32 %v522, %v523
    %v525 = vrot.slane %v524, 1
    %v526 = vadd.f32 %v524, %v525
    %v527 = vadd.f32 %v478, %v480
    %v528 = vrot.slane %v527, 4
    %v529 = vadd.f32 %v527, %v528
    %v530 = vrot.slane %v529, 2
    %v531 = vadd.f32 %v529, %v530
    %v532 = vrot.slane %v531, 1
    %v533 = vadd.f32 %v531, %v532
    %v534 = vadd.f32 %v482, %v484
    %v535 = vrot.slane %v534, 4
    %v536 = vadd.f32 %v534, %v535
    %v537 = vrot.slane %v536, 2
    %v538 = vadd.f32 %v536, %v537
    %v539 = vrot.slane %v538, 1
    %v540 = vadd.f32 %v538, %v539
    %v541 = vrcp.pop %v491
    %v542 = vrcp.pop %v498
    %v543 = vrcp.pop %v505
    %v544 = vrcp.pop %v512
    %v545 = vrcp.pop %v519
    %v546 = vrcp.pop %v526
    %v547 = vrcp.pop %v533
    %v548 = vrcp.pop %v540
    %v549 = vmul.f32 %v454, %v541
    %v550 = vmul.f32 %v456, %v541
    %v551 = vmul.f32 %v458, %v542
    %v552 = vmul.f32 %v460, %v542
    %v553 = vmul.f32 %v462, %v543
    %v554 = vmul.f32 %v464, %v543
    %v555 = vmul.f32 %v466, %v544
    %v556 = vmul.f32 %v468, %v544
    %v557 = vmul.f32 %v470, %v545
    %v558 = vmul.f32 %v472, %v545
    %v559 = vmul.f32 %v474, %v546
    %v560 = vmul.f32 %v476, %v546
    %v561 = vmul.f32 %v478, %v547
    %v562 = vmul.f32 %v480, %v547
    %v563 = vmul.f32 %v482, %v548
    %v564 = vmul.f32 %v484, %v548
    %v565 = vunpack.c.l.bf16 %v44
    %v566 = vunpack.c.l.bf16 %v45
    %v567 = vunpack.c.l.bf16 %v46
    %v568 = vunpack.c.l.bf16 %v47
    %v569 = vunpack.c.l.bf16 %v48
    %v570 = vunpack.c.l.bf16 %v49
    %v571 = vunpack.c.l.bf16 %v50
    %v572 = vunpack.c.l.bf16 %v51
    %v573 = vunpack.c.l.bf16 %v52
    %v574 = vunpack.c.l.bf16 %v53
    %v575 = vunpack.c.l.bf16 %v54
    %v576 = vunpack.c.l.bf16 %v55
    %v577 = vunpack.c.l.bf16 %v56
    %v578 = vunpack.c.l.bf16 %v57
    %v579 = vunpack.c.l.bf16 %v58
    %v580 = vunpack.c.l.bf16 %v59
    %v581 = vmul.f32 %v565, %v549
    %v582 = vmul.f32 %v566, %v550
    %v583 = vmul.f32 %v567, %v551
    %v584 = vmul.f32 %v568, %v552
    %v585 = vmul.f32 %v569, %v553
    %v586 = vmul.f32 %v570, %v554
    %v587 = vmul.f32 %v571, %v555
    %v588 = vmul.f32 %v572, %v556
    %v589 = vmul.f32 %v573, %v557
    %v590 = vmul.f32 %v574, %v558
    %v591 = vmul.f32 %v575, %v559
    %v592 = vmul.f32 %v576, %v560
    %v593 = vmul.f32 %v577, %v561
    %v594 = vmul.f32 %v578, %v562
    %v595 = vmul.f32 %v579, %v563
    %v596 = vmul.f32 %v580, %v564
    %v597 = vadd.f32 %v581, %v582
    %v598 = vrot.slane %v597, 4
    %v599 = vadd.f32 %v597, %v598
    %v600 = vrot.slane %v599, 2
    %v601 = vadd.f32 %v599, %v600
    %v602 = vrot.slane %v601, 1
    %v603 = vadd.f32 %v601, %v602
    %v604 = vadd.f32 %v583, %v584
    %v605 = vrot.slane %v604, 4
    %v606 = vadd.f32 %v604, %v605
    %v607 = vrot.slane %v606, 2
    %v608 = vadd.f32 %v606, %v607
    %v609 = vrot.slane %v608, 1
    %v610 = vadd.f32 %v608, %v609
    %v611 = vadd.f32 %v585, %v586
    %v612 = vrot.slane %v611, 4
    %v613 = vadd.f32 %v611, %v612
    %v614 = vrot.slane %v613, 2
    %v615 = vadd.f32 %v613, %v614
    %v616 = vrot.slane %v615, 1
    %v617 = vadd.f32 %v615, %v616
    %v618 = vadd.f32 %v587, %v588
    %v619 = vrot.slane %v618, 4
    %v620 = vadd.f32 %v618, %v619
    %v621 = vrot.slane %v620, 2
    %v622 = vadd.f32 %v620, %v621
    %v623 = vrot.slane %v622, 1
    %v624 = vadd.f32 %v622, %v623
    %v625 = vadd.f32 %v589, %v590
    %v626 = vrot.slane %v625, 4
    %v627 = vadd.f32 %v625, %v626
    %v628 = vrot.slane %v627, 2
    %v629 = vadd.f32 %v627, %v628
    %v630 = vrot.slane %v629, 1
    %v631 = vadd.f32 %v629, %v630
    %v632 = vadd.f32 %v591, %v592
    %v633 = vrot.slane %v632, 4
    %v634 = vadd.f32 %v632, %v633
    %v635 = vrot.slane %v634, 2
    %v636 = vadd.f32 %v634, %v635
    %v637 = vrot.slane %v636, 1
    %v638 = vadd.f32 %v636, %v637
    %v639 = vadd.f32 %v593, %v594
    %v640 = vrot.slane %v639, 4
    %v641 = vadd.f32 %v639, %v640
    %v642 = vrot.slane %v641, 2
    %v643 = vadd.f32 %v641, %v642
    %v644 = vrot.slane %v643, 1
    %v645 = vadd.f32 %v643, %v644
    %v646 = vadd.f32 %v595, %v596
    %v647 = vrot.slane %v646, 4
    %v648 = vadd.f32 %v646, %v647
    %v649 = vrot.slane %v648, 2
    %v650 = vadd.f32 %v648, %v649
    %v651 = vrot.slane %v650, 1
    %v652 = vadd.f32 %v650, %v651
    %vm661 = vcmask 1041409
    %v662 = vsel %vm661, %v610, %v603
    %vm663 = vcmask 1042434
    %v664 = vsel %vm663, %v617, %v662
    %vm665 = vcmask 1043459
    %v666 = vsel %vm665, %v624, %v664
    %vm667 = vcmask 1044484
    %v668 = vsel %vm667, %v631, %v666
    %vm669 = vcmask 1045509
    %v670 = vsel %vm669, %v638, %v668
    %vm671 = vcmask 1046534
    %v672 = vsel %vm671, %v645, %v670
    %vm673 = vcmask 1047559
    %v674 = vsel %vm673, %v652, %v672
    %676 = vst [vmem:[#allocation7] sm:$0xff] %v674
    // Predicated region
    $region22: #{tpu_custom_call.1} parent=1 // pred_check
      _
    $region23: #{tpu_custom_call.1} parent=1 // pred_check_branch
      %678 = sbr.rel (0) target = $region25
    $region24: #{tpu_custom_call.1} parent=1 // pred_region
      %s680 = ssub.s32 128, 128
      %681 = vsyncadd [#allocation4], %s680
      %s683 = sshll.u32 [#allocation7], 4
      %s684 = int_to_ptr.vmem [resolvable:$true] %s683
      %686 = dma.vmem_to_hbm [thread:$0]  %s684, 128, %s3, [#allocation4]
    $region25: #{tpu_custom_call.1} parent=1 // pred_fallthru
      _
    // Predicated region
    $region26: #{tpu_custom_call.1} parent=1 // pred_check
      _
    $region27: #{tpu_custom_call.1} parent=1 // pred_check_branch
      %688 = sbr.rel (0) target = $region29
    $region28: #{tpu_custom_call.1} parent=1 // pred_region
      %689 = dma.done [#allocation4], 128
    $region29: #{tpu_custom_call.1} parent=1 // pred_fallthru
      _
    %690 = vsyncpa [#allocation3], 1
    %691 = vsyncpa [#allocation6], 1
    %692 = vsyncpa [#allocation4], 1

</llo_original>
